<compile_context>
chip_gen: v5e
topology: v5e:2x2
jax: 0.10.0
libtpu: 0.0.40
codegen_flags: <defaults>
</compile_context>

<pallas_src>
import jax
import jax.numpy as jnp
from jax import lax
from jax.experimental import pallas as pl
from jax.experimental.pallas import tpu as pltpu


_LANES = 128
_SUBLANES = 8
_MAX_TILE_ROWS = 2048         # (2048,128) f32 block = 1 MiB; x2 inputs x2 buffers = 4 MiB VMEM
_PAD_VALUE = -1e30            # softplus(-1e30) == 0.0 exactly in f32
_PALLAS_MIN_N = 64            # below this, kernel launch overhead dominates -> plain JAX


def _cdiv(a: int, b: int) -> int:
    return -(-a // b)


def _round_up(a: int, m: int) -> int:
    return _cdiv(a, m) * m


def _softplus(x):
    # Numerically stable softplus; matches PyTorch's BCEWithLogitsLoss core term.
    return jnp.maximum(x, 0.0) + jnp.log1p(jnp.exp(-jnp.abs(x)))


def _make_bce_sum_kernel(n_valid: int, tile_rows: int, steps: int, needs_mask: bool):
    """Kernel computing sum_i softplus(-p_i) + softplus(n_i) over all valid elements."""

    def kernel(p_ref, n_ref, out_ref, acc_ref):
        k = pl.program_id(0)

        @pl.when(k == 0)
        def _init():
            acc_ref[...] = jnp.zeros_like(acc_ref)

        def fold_add(mask=None):
            # In-kernel upcast: inputs are DMA'd in their original dtype.
            neg_p = -p_ref[...].astype(jnp.float32)
            neg = n_ref[...].astype(jnp.float32)
            if mask is not None:
                # Mask BEFORE softplus so padded / out-of-bounds garbage never
                # reaches exp/log1p; softplus(-1e30) == 0 exactly in f32.
                neg_p = jnp.where(mask, neg_p, _PAD_VALUE)
                neg = jnp.where(mask, neg, _PAD_VALUE)
            vals = _softplus(neg_p) + _softplus(neg)            # (tile_rows, 128) f32
            # Fold sublane groups into a single vreg-sized accumulator:
            # pure VPU adds, no cross-lane (XLU) work until the final step.
            acc_ref[...] += vals.reshape(
                tile_rows // _SUBLANES, _SUBLANES, _LANES
            ).sum(axis=0)

        if needs_mask:
            # Only the last grid step can contain invalid data (lane padding and
            # grid-overhang rows); keep the bulk path mask-free.
            @pl.when(k < steps - 1)
            def _bulk():
                fold_add()

            @pl.when(k == steps - 1)
            def _tail():
                row_ids = lax.broadcasted_iota(jnp.int32, (tile_rows, _LANES), 0)
                lane_ids = lax.broadcasted_iota(jnp.int32, (tile_rows, _LANES), 1)
                flat = (k * tile_rows + row_ids) * _LANES + lane_ids
                fold_add(mask=flat < n_valid)
        else:
            fold_add()

        @pl.when(k == steps - 1)
        def _finalize():
            out_ref[0, 0] = jnp.sum(acc_ref[...])   # single cross-lane reduce

    return kernel


def bce_loss_with_logits(
    positives: jax.Array,
    negatives: jax.Array,
    *,
    max_tile_rows: int = _MAX_TILE_ROWS,
) -> jax.Array:
    """positives, negatives: 1-D float arrays of the same length N. Returns scalar f32."""
    assert positives.ndim == 1 and negatives.ndim == 1
    assert positives.shape == negatives.shape
    n = positives.shape[0]
    assert n > 0

    if n < _PALLAS_MIN_N:
        # Tiny inputs: kernel launch + per-step overhead dwarfs 2N softplus evals.
        p32 = positives.astype(jnp.float32)
        n32 = negatives.astype(jnp.float32)
        return (jnp.sum(_softplus(-p32)) + jnp.sum(_softplus(n32))) / jnp.float32(n)

    # Row alignment: 8 sublanes, x dtype packing (bf16 packs 2 rows per sublane).
    itemsize = min(jnp.dtype(positives.dtype).itemsize, jnp.dtype(negatives.dtype).itemsize)
    row_align = _SUBLANES * max(1, 4 // max(1, itemsize))

    # Sanitize user tile size (fixes the (8,128) BlockSpec correctness concern).
    max_tile_rows = max(row_align, (int(max_tile_rows) // row_align) * row_align)

    # Lane-dense view: (rows, 128). Pad only to the alignment granule; when N is
    # already aligned the reshape is a bitcast (no extra HBM traffic).
    padded_len = _round_up(n, row_align * _LANES)
    rows = padded_len // _LANES

    # Bounded tiling: choose step count first, then the smallest aligned tile
    # covering it, so quantization waste stays <= ~row_align rows per step.
    steps = _cdiv(rows, max_tile_rows)
    tile_rows = _round_up(_cdiv(rows, steps), row_align)   # <= rows (rows is aligned)
    steps = _cdiv(rows, tile_rows)
    needs_mask = n != steps * tile_rows * _LANES

    def as_rows(x):
        if padded_len != n:
            # Pad value is irrelevant (masked in-kernel on the last step).
            x = jnp.pad(x, (0, padded_len - n))
        return x.reshape(rows, _LANES)

    p2 = as_rows(positives)
    n2 = as_rows(negatives)

    elems = 2 * steps * tile_rows * _LANES
    cost = pl.CostEstimate(
        flops=8 * elems,
        transcendentals=2 * elems,
        bytes_accessed=p2.size * p2.dtype.itemsize + n2.size * n2.dtype.itemsize + 4,
    )

    kernel = _make_bce_sum_kernel(n, tile_rows, steps, needs_mask)

    total = pl.pallas_call(
        kernel,
        out_shape=jax.ShapeDtypeStruct((1, 1), jnp.float32),
        grid_spec=pltpu.PrefetchScalarGridSpec(
            num_scalar_prefetch=0,
            grid=(steps,),
            in_specs=[
                pl.BlockSpec((tile_rows, _LANES), lambda k: (k, 0)),
                pl.BlockSpec((tile_rows, _LANES), lambda k: (k, 0)),
            ],
            out_specs=pl.BlockSpec(
                (1, 1), lambda k: (0, 0), memory_space=pltpu.SMEM
            ),
            scratch_shapes=[pltpu.VMEM((_SUBLANES, _LANES), jnp.float32)],
        ),
        compiler_params=pltpu.CompilerParams(
            dimension_semantics=("arbitrary",),   # reduction axis
        ),
        cost_estimate=cost,
    )(p2, n2)

    return total[0, 0] / jnp.float32(n)


def _reference(positives, negatives):
    p32 = positives.astype(jnp.float32)
    n32 = negatives.astype(jnp.float32)
    return jnp.mean(_softplus(-p32)) + jnp.mean(_softplus(n32))


if __name__ == "__main__":
    def check(p, n, **kw):
        loss = bce_loss_with_logits(p, n, **kw)
        jax.block_until_ready(loss)
        ref = _reference(p, n)
        assert jnp.allclose(loss, ref, atol=1e-5, rtol=1e-5), (loss, ref)

    key = jax.random.PRNGKey(0)
    kp, kn = jax.random.split(key)

    # 1) N not a multiple of 128: minimal alignment pad + in-kernel tail mask.
    N = 1000
    positives = jax.random.normal(kp, (N,), dtype=jnp.float32) * 2.0
    negatives = jax.random.normal(kn, (N,), dtype=jnp.float32) * 2.0
    check(positives, negatives)

    # 2) N aligned (zero-copy reshape), multi-step grid with an out-of-bounds
    #    overhang block on the last step (rows=24, tile_rows=16, steps=2).
    kp2, kn2 = jax.random.split(jax.random.PRNGKey(1))
    p2 = jax.random.normal(kp2, (3072,), dtype=jnp.float32) * 2.0
    n2 = jax.random.normal(kn2, (3072,), dtype=jnp.float32) * 2.0
    check(p2, n2, max_tile_rows=16)

    # 3) N not aligned + small tiles: multi-step accumulation + tail mask.
    kp3, kn3 = jax.random.split(jax.random.PRNGKey(2))
    p3 = jax.random.normal(kp3, (3000,), dtype=jnp.float32) * 2.0
    n3 = jax.random.normal(kn3, (3000,), dtype=jnp.float32) * 2.0
    check(p3, n3, max_tile_rows=8)

    # 4) bf16 logits: DMA'd as bf16 (half the HBM bytes), upcast in-kernel.
    kp4, kn4 = jax.random.split(jax.random.PRNGKey(3))
    p4 = (jax.random.normal(kp4, (2048,), dtype=jnp.float32) * 2.0).astype(jnp.bfloat16)
    n4 = (jax.random.normal(kn4, (2048,), dtype=jnp.float32) * 2.0).astype(jnp.bfloat16)
    check(p4, n4)

    # 5) Tiny-N fast path (plain JAX, no kernel launch).
    check(positives[:8], negatives[:8])

    print("KERNEL_OK")
</pallas_src>

<mosaic_0001>
module attributes {stable_mosaic.version = 11 : i64} {
  func.func @kernel(%arg0: i32, %arg1: memref<8x128xf32, #tpu.memory_space<vmem>>, %arg2: memref<8x128xf32, #tpu.memory_space<vmem>>, %arg3: memref<1x1xf32, #tpu.memory_space<smem>>, %arg4: memref<8x128xf32, #tpu.memory_space<vmem>>) attributes {dimension_semantics = [#tpu.dimension_semantics<arbitrary>], iteration_bounds = array<i64: 1>, scalar_prefetch = 0 : i64, scratch_operands = 1 : i64, tpu.core_type = #tpu.core_type<tc>, window_params = [{transform_indices = @transform_0, window_bounds = array<i64: 8, 128>}, {transform_indices = @transform_1, window_bounds = array<i64: 8, 128>}, {transform_indices = @transform_2, window_bounds = array<i64: 1, 1>}]} {
    %c0_i32 = arith.constant 0 : i32
    %0 = arith.cmpi eq, %arg0, %c0_i32 : i32
    %1 = arith.extui %0 : i1 to i32
    %c0_i32_0 = arith.constant 0 : i32
    %2 = arith.cmpi ne, %1, %c0_i32_0 : i32
    scf.if %2 {
      %cst = arith.constant 0.000000e+00 : f32
      %12 = vector.broadcast %cst : f32 to vector<8x128xf32>
      %c0 = arith.constant 0 : index
      %c0_7 = arith.constant 0 : index
      %13 = vector.load %arg4[%c0, %c0_7] : memref<8x128xf32, #tpu.memory_space<vmem>>, vector<8x128xf32>
      tpu.vector_store %arg4[%c0, %c0_7], %12 {strides = array<i32>} : memref<8x128xf32, #tpu.memory_space<vmem>>, vector<8x128xf32>,
    } else {
    }
    %c0_i32_1 = arith.constant 0 : i32
    %3 = arith.cmpi slt, %arg0, %c0_i32_1 : i32
    %4 = arith.extui %3 : i1 to i32
    %c0_i32_2 = arith.constant 0 : i32
    %5 = arith.cmpi ne, %4, %c0_i32_2 : i32
    scf.if %5 {
      %c0 = arith.constant 0 : index
      %c0_7 = arith.constant 0 : index
      %12 = vector.load %arg1[%c0, %c0_7] : memref<8x128xf32, #tpu.memory_space<vmem>>, vector<8x128xf32>
      %cst = arith.constant 0.000000e+00 : f32
      %13 = vector.broadcast %cst : f32 to vector<8x128xf32>
      %14 = arith.subf %13, %12 : vector<8x128xf32>
      %c0_8 = arith.constant 0 : index
      %c0_9 = arith.constant 0 : index
      %15 = vector.load %arg2[%c0_8, %c0_9] : memref<8x128xf32, #tpu.memory_space<vmem>>, vector<8x128xf32>
      %cst_10 = arith.constant 0.000000e+00 : f32
      %16 = vector.broadcast %cst_10 : f32 to vector<8x128xf32>
      %17 = arith.maximumf %14, %16 : vector<8x128xf32>
      %18 = math.absf %14 : vector<8x128xf32>
      %cst_11 = arith.constant 0.000000e+00 : f32
      %19 = vector.broadcast %cst_11 : f32 to vector<8x128xf32>
      %20 = arith.subf %19, %18 : vector<8x128xf32>
      %21 = math.exp %20 : vector<8x128xf32>
      %22 = math.log1p %21 : vector<8x128xf32>
      %23 = arith.addf %17, %22 : vector<8x128xf32>
      %cst_12 = arith.constant 0.000000e+00 : f32
      %24 = vector.broadcast %cst_12 : f32 to vector<8x128xf32>
      %25 = arith.maximumf %15, %24 : vector<8x128xf32>
      %26 = math.absf %15 : vector<8x128xf32>
      %cst_13 = arith.constant 0.000000e+00 : f32
      %27 = vector.broadcast %cst_13 : f32 to vector<8x128xf32>
      %28 = arith.subf %27, %26 : vector<8x128xf32>
      %29 = math.exp %28 : vector<8x128xf32>
      %30 = math.log1p %29 : vector<8x128xf32>
      %31 = arith.addf %25, %30 : vector<8x128xf32>
      %32 = arith.addf %23, %31 : vector<8x128xf32>
      %c0_14 = arith.constant 0 : index
      %c0_15 = arith.constant 0 : index
      %33 = vector.load %arg4[%c0_14, %c0_15] : memref<8x128xf32, #tpu.memory_space<vmem>>, vector<8x128xf32>
      %34 = vector.shape_cast %32 : vector<8x128xf32> to vector<1x8x128xf32>
      %cst_16 = arith.constant dense<0.000000e+00> : vector<8x128xf32>
      %35 = vector.multi_reduction <add>, %34, %cst_16 [0] : vector<1x8x128xf32> to vector<8x128xf32>
      %36 = arith.addf %33, %35 : vector<8x128xf32>
      %c0_17 = arith.constant 0 : index
      %c0_18 = arith.constant 0 : index
      %37 = vector.load %arg4[%c0_17, %c0_18] : memref<8x128xf32, #tpu.memory_space<vmem>>, vector<8x128xf32>
      tpu.vector_store %arg4[%c0_17, %c0_18], %36 {strides = array<i32>} : memref<8x128xf32, #tpu.memory_space<vmem>>, vector<8x128xf32>,
    } else {
    }
    %c0_i32_3 = arith.constant 0 : i32
    %6 = arith.cmpi eq, %arg0, %c0_i32_3 : i32
    %7 = arith.extui %6 : i1 to i32
    %c0_i32_4 = arith.constant 0 : i32
    %8 = arith.cmpi ne, %7, %c0_i32_4 : i32
    scf.if %8 {
      %12 = tpu.iota {dimensions = array<i32: 0>} : vector<8x128xi32>
      %13 = tpu.iota {dimensions = array<i32: 1>} : vector<8x128xi32>
      %c8_i32 = arith.constant 8 : i32
      %14 = arith.muli %arg0, %c8_i32 : i32
      %15 = vector.broadcast %14 : i32 to vector<8x128xi32>
      %16 = arith.addi %15, %12 : vector<8x128xi32>
      %c128_i32 = arith.constant 128 : i32
      %17 = vector.broadcast %c128_i32 : i32 to vector<8x128xi32>
      %18 = arith.muli %16, %17 : vector<8x128xi32>
      %19 = arith.addi %18, %13 : vector<8x128xi32>
      %c1000_i32 = arith.constant 1000 : i32
      %20 = vector.broadcast %c1000_i32 : i32 to vector<8x128xi32>
      %21 = arith.cmpi slt, %19, %20 : vector<8x128xi32>
      %c0 = arith.constant 0 : index
      %c0_7 = arith.constant 0 : index
      %22 = vector.load %arg1[%c0, %c0_7] : memref<8x128xf32, #tpu.memory_space<vmem>>, vector<8x128xf32>
      %cst = arith.constant 0.000000e+00 : f32
      %23 = vector.broadcast %cst : f32 to vector<8x128xf32>
      %24 = arith.subf %23, %22 : vector<8x128xf32>
      %c0_8 = arith.constant 0 : index
      %c0_9 = arith.constant 0 : index
      %25 = vector.load %arg2[%c0_8, %c0_9] : memref<8x128xf32, #tpu.memory_space<vmem>>, vector<8x128xf32>
      %cst_10 = arith.constant -1.000000e+30 : f32
      %26 = vector.broadcast %cst_10 : f32 to vector<8x128xf32>
      %27 = arith.select %21, %24, %26 : vector<8x128xi1>, vector<8x128xf32>
      %cst_11 = arith.constant -1.000000e+30 : f32
      %28 = vector.broadcast %cst_11 : f32 to vector<8x128xf32>
      %29 = arith.select %21, %25, %28 : vector<8x128xi1>, vector<8x128xf32>
      %cst_12 = arith.constant 0.000000e+00 : f32
      %30 = vector.broadcast %cst_12 : f32 to vector<8x128xf32>
      %31 = arith.maximumf %27, %30 : vector<8x128xf32>
      %32 = math.absf %27 : vector<8x128xf32>
      %cst_13 = arith.constant 0.000000e+00 : f32
      %33 = vector.broadcast %cst_13 : f32 to vector<8x128xf32>
      %34 = arith.subf %33, %32 : vector<8x128xf32>
      %35 = math.exp %34 : vector<8x128xf32>
      %36 = math.log1p %35 : vector<8x128xf32>
      %37 = arith.addf %31, %36 : vector<8x128xf32>
      %cst_14 = arith.constant 0.000000e+00 : f32
      %38 = vector.broadcast %cst_14 : f32 to vector<8x128xf32>
      %39 = arith.maximumf %29, %38 : vector<8x128xf32>
      %40 = math.absf %29 : vector<8x128xf32>
      %cst_15 = arith.constant 0.000000e+00 : f32
      %41 = vector.broadcast %cst_15 : f32 to vector<8x128xf32>
      %42 = arith.subf %41, %40 : vector<8x128xf32>
      %43 = math.exp %42 : vector<8x128xf32>
      %44 = math.log1p %43 : vector<8x128xf32>
      %45 = arith.addf %39, %44 : vector<8x128xf32>
      %46 = arith.addf %37, %45 : vector<8x128xf32>
      %c0_16 = arith.constant 0 : index
      %c0_17 = arith.constant 0 : index
      %47 = vector.load %arg4[%c0_16, %c0_17] : memref<8x128xf32, #tpu.memory_space<vmem>>, vector<8x128xf32>
      %48 = vector.shape_cast %46 : vector<8x128xf32> to vector<1x8x128xf32>
      %cst_18 = arith.constant dense<0.000000e+00> : vector<8x128xf32>
      %49 = vector.multi_reduction <add>, %48, %cst_18 [0] : vector<1x8x128xf32> to vector<8x128xf32>
      %50 = arith.addf %47, %49 : vector<8x128xf32>
      %c0_19 = arith.constant 0 : index
      %c0_20 = arith.constant 0 : index
      %51 = vector.load %arg4[%c0_19, %c0_20] : memref<8x128xf32, #tpu.memory_space<vmem>>, vector<8x128xf32>
      tpu.vector_store %arg4[%c0_19, %c0_20], %50 {strides = array<i32>} : memref<8x128xf32, #tpu.memory_space<vmem>>, vector<8x128xf32>,
    } else {
    }
    %c0_i32_5 = arith.constant 0 : i32
    %9 = arith.cmpi eq, %arg0, %c0_i32_5 : i32
    %10 = arith.extui %9 : i1 to i32
    %c0_i32_6 = arith.constant 0 : i32
    %11 = arith.cmpi ne, %10, %c0_i32_6 : i32
    scf.if %11 {
      %c0 = arith.constant 0 : index
      %c0_7 = arith.constant 0 : index
      %12 = vector.load %arg4[%c0, %c0_7] : memref<8x128xf32, #tpu.memory_space<vmem>>, vector<8x128xf32>
      %13 = vector.shape_cast %12 : vector<8x128xf32> to vector<1x8x128xf32>
      %cst = arith.constant dense<0.000000e+00> : vector<1xf32>
      %14 = vector.multi_reduction <add>, %13, %cst [1, 2] : vector<1x8x128xf32> to vector<1xf32>
      %15 = vector.shape_cast %14 : vector<1xf32> to vector<1x1x1xf32>
      %16 = vector.extract %15[0, 0, 0] : f32 from vector<1x1x1xf32>
      %c0_8 = arith.constant 0 : index
      %c0_9 = arith.constant 0 : index
      %17 = memref.load %arg3[%c0_8, %c0_9] : memref<1x1xf32, #tpu.memory_space<smem>>
      memref.store %16, %arg3[%c0_8, %c0_9] : memref<1x1xf32, #tpu.memory_space<smem>>
    } else {
    }
    return
  }
  func.func @transform_0(%arg0: i32) -> (i32, i32) {
    %c0_i32 = arith.constant 0 : i32
    %c0_i32_0 = arith.constant 0 : i32
    return %arg0, %c0_i32 : i32, i32
  }
  func.func @transform_1(%arg0: i32) -> (i32, i32) {
    %c0_i32 = arith.constant 0 : i32
    %c0_i32_0 = arith.constant 0 : i32
    return %arg0, %c0_i32 : i32, i32
  }
  func.func @transform_2(%arg0: i32) -> (i32, i32) {
    %c0_i32 = arith.constant 0 : i32
    %c0_i32_0 = arith.constant 0 : i32
    %c0_i32_1 = arith.constant 0 : i32
    return %c0_i32, %c0_i32_0 : i32, i32
  }
}

</mosaic_0001>

<llo_original>
// kernel: tpu_custom_call.1
$region0: #{tpu_custom_call.1}
  #allocation0 [shape = 'u32[]', space=smem, size = 0x4, offset = 0x4, fixed_abs, tag = 'smem constant byte address 0x4 - core index']
  #allocation1 [shape = 'u32[72,128]{1,0:T(1,128)}', space=vmem, size = 0x9000, scoped, tag = 'internal scratch']
  #allocation2 [shape = 'f32[8,128]{1,0:T(8,128)}', space=vmem, size = 0x1000, scoped, tag = 'scratch operand']
  %s0 = inlined_call_operand.hbm [shape: f32[8,128], index: 0, kind: input, shape index: {}]
  %s1 = inlined_call_operand.hbm [shape: f32[8,128], index: 1, kind: input, shape index: {}]
  %s2 = inlined_call_operand.hbm [shape: f32[1,1], index: 2, kind: output, shape index: {}]
  %s3 = sld [smem:[#allocation0]]
  $region38: #{tpu_custom_call.1} parent=0
    _
  %s5 = ssub.s32 1, %s3
  %s6 = scalar_select 0, %s5, %s3
  $region1: #{tpu_custom_call.1} parent=0
    #allocation3 [shape = 'u8[4096]{0}', space=vmem, size = 0x1000, scoped, tag = 'input window, operand 0, single buffered']
    #allocation4 [shape = 's32[1]{0}', space=sflag, size = 0x4, scoped, tag = 'scoped memory for tpu_custom_call.1']
    #allocation5 [shape = 's32[1]{0}', space=sflag, size = 0x4, scoped, tag = 'scoped memory for tpu_custom_call.1']
    #allocation6 [shape = 'u8[4096]{0}', space=vmem, size = 0x1000, scoped, tag = 'input window, operand 1, single buffered']
    #allocation7 [shape = 's32[1]{0}', space=sflag, size = 0x4, scoped, tag = 'scoped memory for tpu_custom_call.1']
    #allocation8 [shape = 'u8[512]{0}', space=smem, size = 0x200, scoped, tag = 'output window, operand 0, single buffered']
    %7 = vsyncpa [#allocation4], 0
    %8 = vsyncpa [#allocation7], 0
    %9 = vsyncpa [#allocation5], 0
    // Predicated region
    $region2: #{tpu_custom_call.1} parent=1 // pred_check
      _
    $region3: #{tpu_custom_call.1} parent=1 // pred_check_branch
      %11 = sbr.rel (0) target = $region5
    $region4: #{tpu_custom_call.1} parent=1 // pred_region
      %13 = vsyncadd [#allocation4], 0
      %s15 = sshll.u32 %s0, 4
      %s16 = int_to_ptr.hbm [resolvable:$true] %s15
      %s17 = sshll.u32 [#allocation3], 4
      %s18 = int_to_ptr.vmem [resolvable:$true] %s17
      %20 = dma.hbm_to_vmem [thread:$0]  %s16, 128, %s18, [#allocation4]
    $region5: #{tpu_custom_call.1} parent=1 // pred_fallthru
      _
    // Predicated region
    $region6: #{tpu_custom_call.1} parent=1 // pred_check
      _
    $region7: #{tpu_custom_call.1} parent=1 // pred_check_branch
      %22 = sbr.rel (0) target = $region9
    $region8: #{tpu_custom_call.1} parent=1 // pred_region
      %24 = vsyncadd [#allocation7], 0
      %s26 = sshll.u32 %s1, 4
      %s27 = int_to_ptr.hbm [resolvable:$true] %s26
      %s28 = sshll.u32 [#allocation6], 4
      %s29 = int_to_ptr.vmem [resolvable:$true] %s28
      %31 = dma.hbm_to_vmem [thread:$0]  %s27, 128, %s29, [#allocation7]
    $region9: #{tpu_custom_call.1} parent=1 // pred_fallthru
      _
    // Predicated region
    $region10: #{tpu_custom_call.1} parent=1 // pred_check
      _
    $region11: #{tpu_custom_call.1} parent=1 // pred_check_branch
      %33 = sbr.rel (0) target = $region13
    $region12: #{tpu_custom_call.1} parent=1 // pred_region
      %35 = dma.done [#allocation4], 128
    $region13: #{tpu_custom_call.1} parent=1 // pred_fallthru
      _
    // Predicated region
    $region14: #{tpu_custom_call.1} parent=1 // pred_check
      _
    $region15: #{tpu_custom_call.1} parent=1 // pred_check_branch
      %37 = sbr.rel (0) target = $region17
    $region16: #{tpu_custom_call.1} parent=1 // pred_region
      %39 = dma.done [#allocation7], 128
    $region17: #{tpu_custom_call.1} parent=1 // pred_fallthru
      _
    %p40 = scmp.eq.s32.totalorder 0, 0
    // Predicated region
    $region18: #{tpu_custom_call.1} parent=1 // pred_check
      %p41 = pneg %p40
    $region19: #{tpu_custom_call.1} parent=1 // pred_check_branch
      %43 = sbr.rel (%p41) target = $region21
    $region20: #{tpu_custom_call.1} parent=1 // pred_region
      %44 = vst [vmem:[#allocation2] sm:$0xff] 0.0
    $region21: #{tpu_custom_call.1} parent=1 // pred_fallthru
      _
    %p45 = scmp.lt.s32.totalorder 0, 0
    // Predicated region
    $region22: #{tpu_custom_call.1} parent=1 // pred_check
      %p46 = pneg %p45
    $region23: #{tpu_custom_call.1} parent=1 // pred_check_branch
      %48 = sbr.rel (%p46) target = $region25
    $region24: #{tpu_custom_call.1} parent=1 // pred_region
      %v49 = vld [vmem:[#allocation3] sm:$0xff]
      %v50 = vsub.f32 0.0, %v49
      %v51 = vld [vmem:[#allocation6] sm:$0xff]
      %v52 = vmax.f32 %v50, 0.0
      %v53 = vand.u32 2147483647, %v50
      %v54 = vsub.f32 0.0, %v53
      %v55 = vmul.f32 %v54, 1.442695
      %v56 = vpow.pop %v55
      %v57 = vadd.f32 %v56, 1.0
      %v58 = vlog2.pop %v57
      %v59 = vmul.f32 %v58, 0.6931472
      %v60 = vmul.f32 -0.5, %v56
      %v61 = vadd.f32 %v60, 1.0
      %v62 = vmul.f32 %v61, %v56
      %v63 = vand.u32 2147483647, %v56
      %vm64 = vcmp.lt.f32.partialorder %v63, 0.0004427343
      %v65 = vsel %vm64, %v62, %v59
      %v66 = vadd.f32 %v52, %v65
      %v67 = vmax.f32 %v51, 0.0
      %v68 = vand.u32 2147483647, %v51
      %v69 = vsub.f32 0.0, %v68
      %v70 = vmul.f32 %v69, 1.442695
      %v71 = vpow.pop %v70
      %v72 = vadd.f32 %v71, 1.0
      %v73 = vlog2.pop %v72
      %v74 = vmul.f32 %v73, 0.6931472
      %v75 = vmul.f32 -0.5, %v71
      %v76 = vadd.f32 %v75, 1.0
      %v77 = vmul.f32 %v76, %v71
      %v78 = vand.u32 2147483647, %v71
      %vm79 = vcmp.lt.f32.partialorder %v78, 0.0004427343
      %v80 = vsel %vm79, %v77, %v74
      %v81 = vadd.f32 %v67, %v80
      %v82 = vadd.f32 %v66, %v81
      %v83 = vld [vmem:[#allocation2] sm:$0xff]
      %v84 = vadd.f32 %v82, 0.0
      %v85 = vadd.f32 %v83, %v84
      %86 = vst [vmem:[#allocation2] sm:$0xff] %v85
    $region25: #{tpu_custom_call.1} parent=1 // pred_fallthru
      _
    // Predicated region
    $region26: #{tpu_custom_call.1} parent=1 // pred_check
      %p87 = pneg %p40
    $region27: #{tpu_custom_call.1} parent=1 // pred_check_branch
      %89 = sbr.rel (%p87) target = $region29
    $region28: #{tpu_custom_call.1} parent=1 // pred_region
      %v90 = vlaneseq
      %v91 = vshrl.u32 %v90, 7
      %v92 = vlaneseq
      %v93 = vand.u32 %v92, 127
      %s94 = smul.u32 0, 8
      %v95 = vstv %s94
      %v96 = vadd.s32 %v95, %v91
      %v97 = vmul.u32 %v96, 128
      %v98 = vadd.s32 %v97, %v93
      %vm99 = vcmp.lt.s32.totalorder %v98, 1000
      %v100 = vld [vmem:[#allocation3] sm:$0xff]
      %v101 = vsub.f32 0.0, %v100
      %v102 = vld [vmem:[#allocation6] sm:$0xff]
      %v103 = vsel %vm99, %v101, -1e+30
      %v104 = vsel %vm99, %v102, -1e+30
      %v105 = vmax.f32 %v103, 0.0
      %v106 = vand.u32 2147483647, %v103
      %v107 = vsub.f32 0.0, %v106
      %v108 = vmul.f32 %v107, 1.442695
      %v109 = vpow.pop %v108
      %v110 = vadd.f32 %v109, 1.0
      %v111 = vlog2.pop %v110
      %v112 = vmul.f32 %v111, 0.6931472
      %v113 = vmul.f32 -0.5, %v109
      %v114 = vadd.f32 %v113, 1.0
      %v115 = vmul.f32 %v114, %v109
      %v116 = vand.u32 2147483647, %v109
      %vm117 = vcmp.lt.f32.partialorder %v116, 0.0004427343
      %v118 = vsel %vm117, %v115, %v112
      %v119 = vadd.f32 %v105, %v118
      %v120 = vmax.f32 %v104, 0.0
      %v121 = vand.u32 2147483647, %v104
      %v122 = vsub.f32 0.0, %v121
      %v123 = vmul.f32 %v122, 1.442695
      %v124 = vpow.pop %v123
      %v125 = vadd.f32 %v124, 1.0
      %v126 = vlog2.pop %v125
      %v127 = vmul.f32 %v126, 0.6931472
      %v128 = vmul.f32 -0.5, %v124
      %v129 = vadd.f32 %v128, 1.0
      %v130 = vmul.f32 %v129, %v124
      %v131 = vand.u32 2147483647, %v124
      %vm132 = vcmp.lt.f32.partialorder %v131, 0.0004427343
      %v133 = vsel %vm132, %v130, %v127
      %v134 = vadd.f32 %v120, %v133
      %v135 = vadd.f32 %v119, %v134
      %v136 = vld [vmem:[#allocation2] sm:$0xff]
      %v137 = vadd.f32 %v135, 0.0
      %v138 = vadd.f32 %v136, %v137
      %139 = vst [vmem:[#allocation2] sm:$0xff] %v138
      %v140 = vld [vmem:[#allocation2] sm:$0xff]
      %141 = vadd.xlane.f32.xlu0 %v140
      %v142 = vpop.xlane.xlu0 %141
      %v143 = vrot.slane %v142, 4
      %v144 = vadd.f32 %v142, %v143
      %v145 = vrot.slane %v144, 2
      %v146 = vadd.f32 %v144, %v145
      %v147 = vrot.slane %v146, 1
      %v148 = vadd.f32 %v146, %v147
      %s149 = vtos %v148
      %s150 = scalar_lea.smem [#allocation8], 0
      %151 = sst [smem:[%s150]] %s149
    $region29: #{tpu_custom_call.1} parent=1 // pred_fallthru
      _
    // Predicated region
    $region30: #{tpu_custom_call.1} parent=1 // pred_check
      _
    $region31: #{tpu_custom_call.1} parent=1 // pred_check_branch
      %153 = sbr.rel (0) target = $region33
    $region32: #{tpu_custom_call.1} parent=1 // pred_region
      %155 = vsyncadd [#allocation5], 0
      %s157 = sshll.u32 %s2, 4
      %s158 = int_to_ptr.hbm [resolvable:$true] %s157
      %160 = dma.smem_to_hbm [#allocation8], 16, %s158, [#allocation5]
    $region33: #{tpu_custom_call.1} parent=1 // pred_fallthru
      _
    // Predicated region
    $region34: #{tpu_custom_call.1} parent=1 // pred_check
      _
    $region35: #{tpu_custom_call.1} parent=1 // pred_check_branch
      %162 = sbr.rel (0) target = $region37
    $region36: #{tpu_custom_call.1} parent=1 // pred_region
      %164 = dma.done [#allocation5], 16
    $region37: #{tpu_custom_call.1} parent=1 // pred_fallthru
      _
    %165 = sfence
    %166 = vsyncpa [#allocation4], 1
    %167 = vsyncpa [#allocation7], 1
    %168 = vsyncpa [#allocation5], 1

</llo_original>
